<compile_context>
chip_gen: v6e
topology: v6e:2x2x1
jax: 0.10.0
libtpu: 0.0.40
codegen_flags: <defaults>
</compile_context>

<pallas_src>
import functools
import math

import jax
import jax.numpy as jnp
from jax.experimental import pallas as pl
from jax.experimental.pallas import tpu as pltpu

TWO_PI = 2.0 * math.pi
EPS = 1e-6              # kornia rgb_to_hsv saturation epsilon
LANES = 128
SUBLANES = 16           # 16-align rows so bf16 (16,128) min tiles also work
MAX_BLOCK_ROWS = 2048   # 2048 * 128 * 4B * 3ch = 3 MiB per block per buffer


def _round_up(a: int, m: int) -> int:
    return -(-a // m) * m


def _adjust_hue_kernel(x_ref, o_ref, *, shift6):
    # x_ref / o_ref: VMEM (1, 3, block_rows, 128)
    r = x_ref[0, 0].astype(jnp.float32)
    g = x_ref[0, 1].astype(jnp.float32)
    b = x_ref[0, 2].astype(jnp.float32)

    # ---- rgb -> hsv (only the pieces we need) ----
    maxc = jnp.maximum(jnp.maximum(r, g), b)
    minc = jnp.minimum(jnp.minimum(r, g), b)
    v = maxc
    deltac = maxc - minc
    deltac_safe = jnp.where(deltac == 0.0, 1.0, deltac)
    ve = v + EPS

    # Fused reciprocal: one EUP approx reciprocal of the product + one Newton
    # step yields both 1/(v+EPS) and 1/deltac_safe (halves EUP pushes).
    prod = ve * deltac_safe
    rp = pl.reciprocal(prod, approx=True)
    rp = rp * (2.0 - prod * rp)
    rv = deltac_safe * rp           # ~ 1 / (v + EPS)
    rd = ve * rp                    # ~ 1 / deltac_safe

    vs = v * (deltac * rv)          # v * s

    # candidate hues per arg-max channel (first max wins, like kornia's gather)
    is_r = r == maxc
    is_g = jnp.logical_and(g == maxc, jnp.logical_not(is_r))
    h_raw = jnp.where(is_r, g - b,
            jnp.where(is_g, 2.0 * deltac + b - r, 4.0 * deltac + r - g))

    # Hue in sextant units ([0,6)) with the hue shift folded in.  This is the
    # exact collapse of: rgb_to_hsv (h in [0,2pi)) -> fmod(h+hue, 2pi) ->
    # hsv_to_rgb's floor(h*3/pi)%6 + frac: intermediate mods are redundant
    # modulo 6 and the RGB output is continuous across sector wraps.
    # shift6 is pre-wrapped into [0,6), h_raw*rd is in [-1,5], so t is in
    # [-1, 11) and two cheap VALU wraps replace the float floor-mod.
    t = h_raw * rd + shift6
    t = jnp.where(t < 0.0, t + 6.0, t)
    hm = jnp.where(t >= 6.0, t - 6.0, t)

    out_dtype = o_ref.dtype

    # closed-form hsv -> rgb: c = v - v*s*clamp(min(k, 4-k), 0, 1), k=(n+h6)%6
    def chan(n):
        k = n + hm                          # in [n, n+6)
        k = jnp.where(k >= 6.0, k - 6.0, k)
        w = jnp.clip(jnp.minimum(k, 4.0 - k), 0.0, 1.0)
        return (v - vs * w).astype(out_dtype)

    o_ref[0, 0] = chan(5.0)
    o_ref[0, 1] = chan(3.0)
    o_ref[0, 2] = chan(1.0)


@functools.partial(jax.jit, static_argnames=("hue_factor",))
def _adjust_hue_impl(x: jax.Array, hue_factor: float) -> jax.Array:
    N, C, H, W = x.shape
    S = H * W

    # Pad S only as far as the (rows, 128) lane-dense reshape requires.
    rows = _round_up(_round_up(S, LANES) // LANES, SUBLANES)
    S_pad = rows * LANES

    xf = x.reshape(N, C, S)
    if S_pad != S:
        xf = jnp.pad(xf, ((0, 0), (0, 0), (0, S_pad - S)))
    xr = xf.reshape(N, C, rows, LANES)

    block_rows = min(MAX_BLOCK_ROWS, rows)
    if N == 1 and rows >= 2 * SUBLANES:
        # Guarantee >= 2 grid steps so both v7x TensorCores get work.
        block_rows = min(block_rows, _round_up(-(-rows // 2), SUBLANES))
    num_tiles = pl.cdiv(rows, block_rows)   # ragged last block is masked

    # hue shift in sextant units, pre-wrapped into [0, 6)
    shift6 = (float(hue_factor) * (3.0 / math.pi)) % 6.0
    kernel = functools.partial(_adjust_hue_kernel, shift6=shift6)

    cost = pl.CostEstimate(
        flops=40 * N * S_pad,
        transcendentals=N * S_pad,
        bytes_accessed=2 * N * C * S_pad * x.dtype.itemsize,
    )

    out = pl.pallas_call(
        kernel,
        out_shape=jax.ShapeDtypeStruct(xr.shape, x.dtype),
        grid_spec=pltpu.PrefetchScalarGridSpec(
            num_scalar_prefetch=0,
            grid=(N, num_tiles),
            in_specs=[pl.BlockSpec((1, C, block_rows, LANES),
                                   lambda n, t: (n, 0, t, 0))],
            out_specs=pl.BlockSpec((1, C, block_rows, LANES),
                                   lambda n, t: (n, 0, t, 0)),
        ),
        compiler_params=pltpu.CompilerParams(
            dimension_semantics=("parallel", "parallel"),
            vmem_limit_bytes=32 * 1024 * 1024),
        cost_estimate=cost,
    )(xr)

    if S_pad != S:
        out = out.reshape(N, C, S_pad)[:, :, :S]
    return out.reshape(N, C, H, W)


def adjust_hue_pallas(x: jax.Array, hue_factor: float) -> jax.Array:
    """x: (N, 3, H, W) RGB in [0,1]; hue_factor in [-pi, pi]."""
    hf = float(hue_factor)
    if hf < -math.pi or hf > math.pi:
        raise ValueError(f"Hue-factor must be in the range [-PI, PI]. Got {hf}")
    assert x.shape[1] == 3
    return _adjust_hue_impl(x, hf)


def _adjust_hue_ref(x: jax.Array, hue_factor: float) -> jax.Array:
    """Pure-JAX reference: kornia rgb_to_hsv -> adjust_hue_raw -> hsv_to_rgb."""
    r, g, b = x[:, 0], x[:, 1], x[:, 2]
    maxc = jnp.maximum(jnp.maximum(r, g), b)
    minc = jnp.minimum(jnp.minimum(r, g), b)
    v = maxc
    d = maxc - minc
    s = d / (v + EPS)
    ds = jnp.where(d == 0.0, 1.0, d)
    is_r = r == maxc
    is_g = (g == maxc) & ~is_r
    h = jnp.where(is_r, g - b, jnp.where(is_g, 2.0 * d + b - r, 4.0 * d + r - g))
    h = ((h / ds) / 6.0) % 1.0 * TWO_PI
    h = jnp.fmod(h + hue_factor, TWO_PI)          # torch.fmod semantics
    h6 = (h / TWO_PI) * 6.0
    hi = jnp.floor(h6) % 6.0
    f = (h6 % 6.0) - hi
    p, q, t = v * (1 - s), v * (1 - f * s), v * (1 - (1 - f) * s)

    def sel(c0, c1, c2, c3, c4, c5):
        return jnp.where(hi == 0, c0, jnp.where(hi == 1, c1, jnp.where(hi == 2, c2,
               jnp.where(hi == 3, c3, jnp.where(hi == 4, c4, c5)))))

    return jnp.stack([sel(v, q, p, p, t, v),
                      sel(t, v, v, q, p, p),
                      sel(p, p, t, v, v, q)], axis=1)


if __name__ == "__main__":
    key = jax.random.PRNGKey(0)

    # Case 1: small batched shape.
    N, C, H, W = 2, 3, 16, 16
    x = jax.random.uniform(key, (N, C, H, W), dtype=jnp.float32)   # RGB in [0,1]
    hue_factor = 0.5
    out = jax.block_until_ready(adjust_hue_pallas(x, hue_factor))
    ref = _adjust_hue_ref(x, hue_factor)
    assert out.shape == x.shape and out.dtype == x.dtype
    assert jnp.allclose(out, ref, atol=1e-4, rtol=1e-4), "mismatch vs reference (case 1)"

    # Case 2: N=1 odd spatial size (exercises padding + ragged grid split) and
    # negative hue.
    key2 = jax.random.PRNGKey(1)
    x2 = jax.random.uniform(key2, (1, 3, 9, 17), dtype=jnp.float32)
    hue2 = -1.25
    out2 = jax.block_until_ready(adjust_hue_pallas(x2, hue2))
    ref2 = _adjust_hue_ref(x2, hue2)
    assert out2.shape == x2.shape
    assert jnp.allclose(out2, ref2, atol=1e-4, rtol=1e-4), "mismatch vs reference (case 2)"

    # Case 3: larger N=1 shape whose rows are not a multiple of block_rows
    # (exercises the ragged last block and the >=2-step split path).
    key3 = jax.random.PRNGKey(2)
    x3 = jax.random.uniform(key3, (1, 3, 56, 56), dtype=jnp.float32)
    hue3 = math.pi
    out3 = jax.block_until_ready(adjust_hue_pallas(x3, hue3))
    ref3 = _adjust_hue_ref(x3, hue3)
    assert jnp.allclose(out3, ref3, atol=1e-4, rtol=1e-4), "mismatch vs reference (case 3)"

    print("KERNEL_OK")
</pallas_src>

<mosaic_0001>
module attributes {stable_mosaic.version = 11 : i64} {
  func.func @_adjust_hue_kernel(%arg0: i32, %arg1: i32, %arg2: memref<1x3x16x128xf32, #tpu.memory_space<vmem>>, %arg3: memref<1x3x16x128xf32, #tpu.memory_space<vmem>>) attributes {dimension_semantics = [#tpu.dimension_semantics<parallel>, #tpu.dimension_semantics<parallel>], iteration_bounds = array<i64: 2, 1>, scalar_prefetch = 0 : i64, scratch_operands = 0 : i64, tpu.core_type = #tpu.core_type<tc>, window_params = [{transform_indices = @transform_0, window_bounds = array<i64: 1, 3, 16, 128>}, {transform_indices = @transform_1, window_bounds = array<i64: 1, 3, 16, 128>}]} {
    %c0 = arith.constant 0 : index
    %c0_0 = arith.constant 0 : index
    %c0_1 = arith.constant 0 : index
    %c0_2 = arith.constant 0 : index
    %0 = vector.load %arg2[%c0, %c0_0, %c0_1, %c0_2] : memref<1x3x16x128xf32, #tpu.memory_space<vmem>>, vector<1x1x16x128xf32>
    %1 = vector.shape_cast %0 : vector<1x1x16x128xf32> to vector<16x128xf32>
    %c0_3 = arith.constant 0 : index
    %c1 = arith.constant 1 : index
    %c0_4 = arith.constant 0 : index
    %c0_5 = arith.constant 0 : index
    %2 = vector.load %arg2[%c0_3, %c1, %c0_4, %c0_5] : memref<1x3x16x128xf32, #tpu.memory_space<vmem>>, vector<1x1x16x128xf32>
    %3 = vector.shape_cast %2 : vector<1x1x16x128xf32> to vector<16x128xf32>
    %c0_6 = arith.constant 0 : index
    %c2 = arith.constant 2 : index
    %c0_7 = arith.constant 0 : index
    %c0_8 = arith.constant 0 : index
    %4 = vector.load %arg2[%c0_6, %c2, %c0_7, %c0_8] : memref<1x3x16x128xf32, #tpu.memory_space<vmem>>, vector<1x1x16x128xf32>
    %5 = vector.shape_cast %4 : vector<1x1x16x128xf32> to vector<16x128xf32>
    %6 = arith.maximumf %1, %3 : vector<16x128xf32>
    %7 = arith.maximumf %6, %5 : vector<16x128xf32>
    %8 = arith.minimumf %1, %3 : vector<16x128xf32>
    %9 = arith.minimumf %8, %5 : vector<16x128xf32>
    %10 = arith.subf %7, %9 : vector<16x128xf32>
    %cst = arith.constant 0.000000e+00 : f32
    %11 = vector.broadcast %cst : f32 to vector<16x128xf32>
    %12 = arith.cmpf oeq, %10, %11 : vector<16x128xf32>
    %cst_9 = arith.constant 1.000000e+00 : f32
    %13 = vector.broadcast %cst_9 : f32 to vector<16x128xf32>
    %14 = arith.select %12, %13, %10 : vector<16x128xi1>, vector<16x128xf32>
    %cst_10 = arith.constant 9.99999997E-7 : f32
    %15 = vector.broadcast %cst_10 : f32 to vector<16x128xf32>
    %16 = arith.addf %7, %15 : vector<16x128xf32>
    %17 = arith.mulf %16, %14 : vector<16x128xf32>
    %18 = tpu.reciprocal %17 {approx = true} : vector<16x128xf32> -> vector<16x128xf32>
    %19 = arith.mulf %17, %18 : vector<16x128xf32>
    %cst_11 = arith.constant 2.000000e+00 : f32
    %20 = vector.broadcast %cst_11 : f32 to vector<16x128xf32>
    %21 = arith.subf %20, %19 : vector<16x128xf32>
    %22 = arith.mulf %18, %21 : vector<16x128xf32>
    %23 = arith.mulf %14, %22 : vector<16x128xf32>
    %24 = arith.mulf %16, %22 : vector<16x128xf32>
    %25 = arith.mulf %10, %23 : vector<16x128xf32>
    %26 = arith.mulf %7, %25 : vector<16x128xf32>
    %27 = arith.cmpf oeq, %1, %7 : vector<16x128xf32>
    %28 = arith.cmpf oeq, %3, %7 : vector<16x128xf32>
    %cst_12 = arith.constant dense<true> : vector<16x128xi1>
    %29 = arith.xori %27, %cst_12 : vector<16x128xi1>
    %30 = arith.andi %28, %29 : vector<16x128xi1>
    %31 = arith.subf %3, %5 : vector<16x128xf32>
    %cst_13 = arith.constant 2.000000e+00 : f32
    %32 = vector.broadcast %cst_13 : f32 to vector<16x128xf32>
    %33 = arith.mulf %32, %10 : vector<16x128xf32>
    %34 = arith.addf %33, %5 : vector<16x128xf32>
    %35 = arith.subf %34, %1 : vector<16x128xf32>
    %cst_14 = arith.constant 4.000000e+00 : f32
    %36 = vector.broadcast %cst_14 : f32 to vector<16x128xf32>
    %37 = arith.mulf %36, %10 : vector<16x128xf32>
    %38 = arith.addf %37, %1 : vector<16x128xf32>
    %39 = arith.subf %38, %3 : vector<16x128xf32>
    %40 = arith.select %30, %35, %39 : vector<16x128xi1>, vector<16x128xf32>
    %41 = arith.select %27, %31, %40 : vector<16x128xi1>, vector<16x128xf32>
    %42 = arith.mulf %41, %24 : vector<16x128xf32>
    %cst_15 = arith.constant 0.477464825 : f32
    %43 = vector.broadcast %cst_15 : f32 to vector<16x128xf32>
    %44 = arith.addf %42, %43 : vector<16x128xf32>
    %cst_16 = arith.constant 0.000000e+00 : f32
    %45 = vector.broadcast %cst_16 : f32 to vector<16x128xf32>
    %46 = arith.cmpf olt, %44, %45 : vector<16x128xf32>
    %cst_17 = arith.constant 6.000000e+00 : f32
    %47 = vector.broadcast %cst_17 : f32 to vector<16x128xf32>
    %48 = arith.addf %44, %47 : vector<16x128xf32>
    %49 = arith.select %46, %48, %44 : vector<16x128xi1>, vector<16x128xf32>
    %cst_18 = arith.constant 6.000000e+00 : f32
    %50 = vector.broadcast %cst_18 : f32 to vector<16x128xf32>
    %51 = arith.cmpf oge, %49, %50 : vector<16x128xf32>
    %cst_19 = arith.constant 6.000000e+00 : f32
    %52 = vector.broadcast %cst_19 : f32 to vector<16x128xf32>
    %53 = arith.subf %49, %52 : vector<16x128xf32>
    %54 = arith.select %51, %53, %49 : vector<16x128xi1>, vector<16x128xf32>
    %cst_20 = arith.constant 5.000000e+00 : f32
    %55 = vector.broadcast %cst_20 : f32 to vector<16x128xf32>
    %56 = arith.addf %55, %54 : vector<16x128xf32>
    %cst_21 = arith.constant 6.000000e+00 : f32
    %57 = vector.broadcast %cst_21 : f32 to vector<16x128xf32>
    %58 = arith.cmpf oge, %56, %57 : vector<16x128xf32>
    %cst_22 = arith.constant 6.000000e+00 : f32
    %59 = vector.broadcast %cst_22 : f32 to vector<16x128xf32>
    %60 = arith.subf %56, %59 : vector<16x128xf32>
    %61 = arith.select %58, %60, %56 : vector<16x128xi1>, vector<16x128xf32>
    %cst_23 = arith.constant 4.000000e+00 : f32
    %62 = vector.broadcast %cst_23 : f32 to vector<16x128xf32>
    %63 = arith.subf %62, %61 : vector<16x128xf32>
    %64 = arith.minimumf %61, %63 : vector<16x128xf32>
    %cst_24 = arith.constant 0.000000e+00 : f32
    %cst_25 = arith.constant 1.000000e+00 : f32
    %65 = vector.broadcast %cst_24 : f32 to vector<16x128xf32>
    %66 = arith.maximumf %65, %64 : vector<16x128xf32>
    %67 = vector.broadcast %cst_25 : f32 to vector<16x128xf32>
    %68 = arith.minimumf %67, %66 : vector<16x128xf32>
    %69 = arith.mulf %26, %68 : vector<16x128xf32>
    %70 = arith.subf %7, %69 : vector<16x128xf32>
    %c0_26 = arith.constant 0 : index
    %c0_27 = arith.constant 0 : index
    %c0_28 = arith.constant 0 : index
    %c0_29 = arith.constant 0 : index
    %71 = vector.load %arg3[%c0_26, %c0_27, %c0_28, %c0_29] : memref<1x3x16x128xf32, #tpu.memory_space<vmem>>, vector<1x1x16x128xf32>
    %72 = vector.shape_cast %71 : vector<1x1x16x128xf32> to vector<16x128xf32>
    %73 = vector.shape_cast %70 : vector<16x128xf32> to vector<1x1x16x128xf32>
    tpu.vector_store %arg3[%c0_26, %c0_27, %c0_28, %c0_29], %73 {strides = array<i32>} : memref<1x3x16x128xf32, #tpu.memory_space<vmem>>, vector<1x1x16x128xf32>,
    %cst_30 = arith.constant 3.000000e+00 : f32
    %74 = vector.broadcast %cst_30 : f32 to vector<16x128xf32>
    %75 = arith.addf %74, %54 : vector<16x128xf32>
    %cst_31 = arith.constant 6.000000e+00 : f32
    %76 = vector.broadcast %cst_31 : f32 to vector<16x128xf32>
    %77 = arith.cmpf oge, %75, %76 : vector<16x128xf32>
    %cst_32 = arith.constant 6.000000e+00 : f32
    %78 = vector.broadcast %cst_32 : f32 to vector<16x128xf32>
    %79 = arith.subf %75, %78 : vector<16x128xf32>
    %80 = arith.select %77, %79, %75 : vector<16x128xi1>, vector<16x128xf32>
    %cst_33 = arith.constant 4.000000e+00 : f32
    %81 = vector.broadcast %cst_33 : f32 to vector<16x128xf32>
    %82 = arith.subf %81, %80 : vector<16x128xf32>
    %83 = arith.minimumf %80, %82 : vector<16x128xf32>
    %cst_34 = arith.constant 0.000000e+00 : f32
    %cst_35 = arith.constant 1.000000e+00 : f32
    %84 = vector.broadcast %cst_34 : f32 to vector<16x128xf32>
    %85 = arith.maximumf %84, %83 : vector<16x128xf32>
    %86 = vector.broadcast %cst_35 : f32 to vector<16x128xf32>
    %87 = arith.minimumf %86, %85 : vector<16x128xf32>
    %88 = arith.mulf %26, %87 : vector<16x128xf32>
    %89 = arith.subf %7, %88 : vector<16x128xf32>
    %c0_36 = arith.constant 0 : index
    %c1_37 = arith.constant 1 : index
    %c0_38 = arith.constant 0 : index
    %c0_39 = arith.constant 0 : index
    %90 = vector.load %arg3[%c0_36, %c1_37, %c0_38, %c0_39] : memref<1x3x16x128xf32, #tpu.memory_space<vmem>>, vector<1x1x16x128xf32>
    %91 = vector.shape_cast %90 : vector<1x1x16x128xf32> to vector<16x128xf32>
    %92 = vector.shape_cast %89 : vector<16x128xf32> to vector<1x1x16x128xf32>
    tpu.vector_store %arg3[%c0_36, %c1_37, %c0_38, %c0_39], %92 {strides = array<i32>} : memref<1x3x16x128xf32, #tpu.memory_space<vmem>>, vector<1x1x16x128xf32>,
    %cst_40 = arith.constant 1.000000e+00 : f32
    %93 = vector.broadcast %cst_40 : f32 to vector<16x128xf32>
    %94 = arith.addf %93, %54 : vector<16x128xf32>
    %cst_41 = arith.constant 6.000000e+00 : f32
    %95 = vector.broadcast %cst_41 : f32 to vector<16x128xf32>
    %96 = arith.cmpf oge, %94, %95 : vector<16x128xf32>
    %cst_42 = arith.constant 6.000000e+00 : f32
    %97 = vector.broadcast %cst_42 : f32 to vector<16x128xf32>
    %98 = arith.subf %94, %97 : vector<16x128xf32>
    %99 = arith.select %96, %98, %94 : vector<16x128xi1>, vector<16x128xf32>
    %cst_43 = arith.constant 4.000000e+00 : f32
    %100 = vector.broadcast %cst_43 : f32 to vector<16x128xf32>
    %101 = arith.subf %100, %99 : vector<16x128xf32>
    %102 = arith.minimumf %99, %101 : vector<16x128xf32>
    %cst_44 = arith.constant 0.000000e+00 : f32
    %cst_45 = arith.constant 1.000000e+00 : f32
    %103 = vector.broadcast %cst_44 : f32 to vector<16x128xf32>
    %104 = arith.maximumf %103, %102 : vector<16x128xf32>
    %105 = vector.broadcast %cst_45 : f32 to vector<16x128xf32>
    %106 = arith.minimumf %105, %104 : vector<16x128xf32>
    %107 = arith.mulf %26, %106 : vector<16x128xf32>
    %108 = arith.subf %7, %107 : vector<16x128xf32>
    %c0_46 = arith.constant 0 : index
    %c2_47 = arith.constant 2 : index
    %c0_48 = arith.constant 0 : index
    %c0_49 = arith.constant 0 : index
    %109 = vector.load %arg3[%c0_46, %c2_47, %c0_48, %c0_49] : memref<1x3x16x128xf32, #tpu.memory_space<vmem>>, vector<1x1x16x128xf32>
    %110 = vector.shape_cast %109 : vector<1x1x16x128xf32> to vector<16x128xf32>
    %111 = vector.shape_cast %108 : vector<16x128xf32> to vector<1x1x16x128xf32>
    tpu.vector_store %arg3[%c0_46, %c2_47, %c0_48, %c0_49], %111 {strides = array<i32>} : memref<1x3x16x128xf32, #tpu.memory_space<vmem>>, vector<1x1x16x128xf32>,
    return
  }
  func.func @transform_0(%arg0: i32, %arg1: i32) -> (i32, i32, i32, i32) {
    %c0_i32 = arith.constant 0 : i32
    %c0_i32_0 = arith.constant 0 : i32
    %c0_i32_1 = arith.constant 0 : i32
    return %arg0, %c0_i32, %arg1, %c0_i32_0 : i32, i32, i32, i32
  }
  func.func @transform_1(%arg0: i32, %arg1: i32) -> (i32, i32, i32, i32) {
    %c0_i32 = arith.constant 0 : i32
    %c0_i32_0 = arith.constant 0 : i32
    %c0_i32_1 = arith.constant 0 : i32
    return %arg0, %c0_i32, %arg1, %c0_i32_0 : i32, i32, i32, i32
  }
}

</mosaic_0001>

<llo_original>
// kernel: _adjust_hue_impl.1
$region0: #{_adjust_hue_impl.1}
  #allocation0 [shape = 'u32[]', space=smem, size = 0x4, offset = 0x4, fixed_abs, tag = 'smem constant byte address 0x4 - core index']
  #allocation1 [shape = 'u32[144,128]{1,0:T(1,128)}', space=vmem, size = 0x12000, scoped, tag = 'internal scratch']
  %s0 = inlined_call_operand.vmem [shape: f32[2,3,16,128], index: 0, kind: input, shape index: {}]
  %s1 = inlined_call_operand.vmem [shape: f32[2,3,16,128], index: 1, kind: output, shape index: {}]
  %s2 = sld [smem:[#allocation0]]
  $region37: #{_adjust_hue_impl.1} parent=0
    _
  %s4 = ssub.s32 1, %s2
  %s5 = scalar_select 0, %s4, %s2
  loop: start=0, step=1, limit=4
  $region2: #{_adjust_hue_impl.1} parent=0 // loop_pre_header
    _
  $region3: #{_adjust_hue_impl.1} parent=0 // loop_header
    %s7 = sphi 0, %s11
    %p8 = scmp.ge.s32.totalorder %s7, 4
    %s14 = sphi 0, %s26
    %s15 = sphi 0, %s22
    %s16 = sphi 0, %s14
    %s17 = sphi 0, %s15
    %s18 = sphi 0, %s16
    %s19 = sphi 0, %s17
    %s31 = sphi 0, %s33
    %s34 = sphi 0, %s31
    %s35 = sphi 0, %s34
    %s51 = sphi 0, %s35
    %s59 = sphi 0, %s61
    %s62 = sphi 0, %s59
    %s63 = sphi 0, %s62
    %s79 = sphi 0, %s63
  $region4: #{_adjust_hue_impl.1} parent=0 // loop_header_branch
    %10 = sbr.rel (%p8) target = $region8
  $region5: #{_adjust_hue_impl.1} parent=0 // loop_body
    %s12 = ssub.s32 %s7, 1
    %s13 = ssub.s32 %s7, 2
    %s20 = sadd.s32 1, %s15
    %p21 = scmp.ge.s32.totalorder %s20, 1
    %s22 = scalar_select %p21, 0, %s20
    %s23 = sadd.s32 1, %s14
    %s24 = scalar_select %p21, %s23, %s14
    %p25 = scmp.ge.s32.totalorder %s24, 2
    %s26 = scalar_select %p25, 0, %s24
    %s27 = ssub.s32 %s14, %s26
    %s28 = ssub.s32 %s15, %s22
    %s29 = sor.u32 %s27, %s28
    %p30 = scmp.eq.s32.totalorder %s29, 0
    %s32 = sadd.s32 %s31, 1
    %s33 = scalar_select %p30, %s31, %s32
    %p36 = pneg %p30
    %p37 = scmp.eq.s32.totalorder %s7, 1
    %p38 = por %p36, %p37
    %p39 = scmp.ne.s32.totalorder %s31, %s34
    %p40 = scmp.eq.s32.totalorder %s7, 0
    %p41 = por %p39, %p40
    %p42 = scmp.ne.s32.totalorder %s31, %s34
    %p43 = scmp.eq.s32.totalorder %s12, 1
    %p44 = por %p42, %p43
    %p45 = scmp.ne.s32.totalorder %s34, %s35
    %p46 = scmp.eq.s32.totalorder %s12, 0
    %p47 = por %p45, %p46
    %p48 = scmp.ne.s32.totalorder %s34, %s35
    %p49 = scmp.eq.s32.totalorder %s13, 1
    %p50 = por %p48, %p49
    %p52 = scmp.ne.s32.totalorder %s35, %s51
    %p53 = scmp.eq.s32.totalorder %s13, 0
    %p54 = por %p52, %p53
    %s55 = ssub.s32 %s14, %s26
    %s56 = ssub.s32 %s15, %s22
    %s57 = sor.u32 %s55, %s56
    %p58 = scmp.eq.s32.totalorder %s57, 0
    %s60 = sadd.s32 %s59, 1
    %s61 = scalar_select %p58, %s59, %s60
    %p64 = pneg %p58
    %p65 = scmp.eq.s32.totalorder %s7, 1
    %p66 = por %p64, %p65
    %p67 = scmp.ne.s32.totalorder %s59, %s62
    %p68 = scmp.eq.s32.totalorder %s7, 0
    %p69 = por %p67, %p68
    %p70 = scmp.ne.s32.totalorder %s59, %s62
    %p71 = scmp.eq.s32.totalorder %s12, 1
    %p72 = por %p70, %p71
    %p73 = scmp.ne.s32.totalorder %s62, %s63
    %p74 = scmp.eq.s32.totalorder %s12, 0
    %p75 = por %p73, %p74
    %p76 = scmp.ne.s32.totalorder %s62, %s63
    %p77 = scmp.eq.s32.totalorder %s13, 1
    %p78 = por %p76, %p77
    %p80 = scmp.ne.s32.totalorder %s63, %s79
    %p81 = scmp.eq.s32.totalorder %s13, 0
    %p82 = por %p80, %p81
    %p83 = scmp.le.s32.totalorder 1, %s7
    %p84 = scmp.lt.s32.totalorder %s7, 3
    %p85 = pnand %p83, %p84
    %p86 = pneg %p85
    // Predicated region
    $region9: #{_adjust_hue_impl.1} parent=5 // pred_check
      _
    $region10: #{_adjust_hue_impl.1} parent=5 // pred_check_branch
      %88 = sbr.rel (%p85) target = $region12
    $region11: #{_adjust_hue_impl.1} parent=5 // pred_region
      %s89 = ssub.s32 %s7, 1
    $region12: #{_adjust_hue_impl.1} parent=5 // pred_fallthru
      _
    %p90 = scmp.lt.s32.totalorder %s7, 2
    // Predicated region
    $region13: #{_adjust_hue_impl.1} parent=5 // pred_check
      %p91 = pneg %p90
    $region14: #{_adjust_hue_impl.1} parent=5 // pred_check_branch
      %93 = sbr.rel (%p91) target = $region16
    $region15: #{_adjust_hue_impl.1} parent=5 // pred_region
      // Predicated region
      $region17: #{_adjust_hue_impl.1} parent=15 // pred_check
        %p94 = pneg %p41
      $region18: #{_adjust_hue_impl.1} parent=15 // pred_check_branch
        %96 = sbr.rel (%p94) target = $region20
      $region19: #{_adjust_hue_impl.1} parent=15 // pred_region
        %s97 = smul.u32 2, %s15
        %p98 = scmp.lt.s32.totalorder %s14, 1
        %s99 = scalar_select %p98, %s14, 1
        %p100 = scmp.lt.s32.totalorder %s97, 1
        %s101 = scalar_select %p100, %s97, 1
        %s102 = smul.addr %s99, 6
        %s103 = sadd.s32 %s101, %s102
        %s104 = smul.addr %s103, 8
        %s105 = scalar_lea.vmem %s0, %s104
        %s106 = smul.u32 2, %s15
      $region20: #{_adjust_hue_impl.1} parent=15 // pred_fallthru
        _
    $region16: #{_adjust_hue_impl.1} parent=5 // pred_fallthru
      _
    %p107 = scmp.le.s32.totalorder 1, %s7
    %p108 = scmp.lt.s32.totalorder %s7, 3
    %p109 = pnand %p107, %p108
    %p110 = pneg %p109
    // Predicated region
    $region21: #{_adjust_hue_impl.1} parent=5 // pred_check
      _
    $region22: #{_adjust_hue_impl.1} parent=5 // pred_check_branch
      %112 = sbr.rel (%p109) target = $region24
    $region23: #{_adjust_hue_impl.1} parent=5 // pred_region
      %s113 = ssub.s32 %s7, 1
      %s114 = smul.u32 2, %s17
      %p115 = scmp.lt.s32.totalorder %s16, 1
      %s116 = scalar_select %p115, %s16, 1
      %p117 = scmp.lt.s32.totalorder %s114, 1
      %s118 = scalar_select %p117, %s114, 1
      %s119 = smul.addr %s116, 6
      %s120 = sadd.s32 %s118, %s119
      %s121 = smul.addr %s120, 8
      %s122 = scalar_lea.vmem %s0, %s121
      %p123 = pneg %p47
      %p124 = pneg %p44
      %p125 = pneg %p75
      %p126 = pneg %p72
      %s127 = smul.u32 2, %s17
      %p128 = scmp.lt.s32.totalorder %s16, 1
      %s129 = scalar_select %p128, %s16, 1
      %p130 = scmp.lt.s32.totalorder %s127, 1
      %s131 = scalar_select %p130, %s127, 1
      %s132 = smul.addr %s129, 6
      %s133 = sadd.s32 %s131, %s132
      %s134 = smul.addr %s133, 8
      %s135 = scalar_lea.vmem %s1, %s134
      %s136 = smul.u32 2, %s17
      %p137 = scmp.lt.s32.totalorder %s16, 1
      %s138 = scalar_select %p137, %s16, 1
      %p139 = scmp.lt.s32.totalorder %s136, 1
      %s140 = scalar_select %p139, %s136, 1
      %s141 = smul.addr %s138, 6
      %s142 = sadd.s32 %s140, %s141
      %s143 = smul.addr %s142, 8
      %s144 = scalar_lea.vmem %s0, %s143
      %s145 = smul.u32 2, %s17
      %s146 = smul.u32 2, %s17
      %p147 = scmp.lt.s32.totalorder %s16, 1
      %s148 = scalar_select %p147, %s16, 1
      %p149 = scmp.lt.s32.totalorder %s146, 1
      %s150 = scalar_select %p149, %s146, 1
      %s151 = smul.addr %s148, 6
      %s152 = sadd.s32 %s150, %s151
      %s153 = smul.addr %s152, 8
      %s154 = scalar_lea.vmem %s1, %s153
      %s155 = smul.u32 2, %s17
      %v156 = vld [vmem:[%s144] sm:$0xff]
      %v157 = vld [vmem:[%s144 + $0x8] sm:$0xff]
      %s158 = scalar_lea.vmem %s144, 16
      %v159 = vld [vmem:[%s158] sm:$0xff]
      %v160 = vld [vmem:[%s158 + $0x8] sm:$0xff]
      %s161 = scalar_lea.vmem %s144, 32
      %v162 = vld [vmem:[%s161] sm:$0xff]
      %v163 = vld [vmem:[%s161 + $0x8] sm:$0xff]
      %v164 = vmax.f32 %v156, %v159
      %v165 = vmax.f32 %v157, %v160
      %v166 = vmax.f32 %v164, %v162
      %v167 = vmax.f32 %v165, %v163
      %v168 = vmin.f32 %v156, %v159
      %v169 = vmin.f32 %v157, %v160
      %v170 = vmin.f32 %v168, %v162
      %v171 = vmin.f32 %v169, %v163
      %v172 = vsub.f32 %v166, %v170
      %v173 = vsub.f32 %v167, %v171
      %vm174 = vcmp.eq.f32.partialorder %v172, 0.0
      %vm175 = vcmp.eq.f32.partialorder %v173, 0.0
      %v176 = vsel %vm174, 1.0, %v172
      %v177 = vsel %vm175, 1.0, %v173
      %v178 = vadd.f32 %v166, 1e-06
      %v179 = vadd.f32 %v167, 1e-06
      %v180 = vmul.f32 %v178, %v176
      %v181 = vmul.f32 %v179, %v177
      %v182 = vrcp.pop %v180
      %v183 = vrcp.pop %v181
      %v184 = vmul.f32 %v180, %v182
      %v185 = vmul.f32 %v181, %v183
      %v186 = vsub.f32 2.0, %v184
      %v187 = vsub.f32 2.0, %v185
      %v188 = vmul.f32 %v182, %v186
      %v189 = vmul.f32 %v183, %v187
      %v190 = vmul.f32 %v176, %v188
      %v191 = vmul.f32 %v177, %v189
      %v192 = vmul.f32 %v178, %v188
      %v193 = vmul.f32 %v179, %v189
      %v194 = vmul.f32 %v172, %v190
      %v195 = vmul.f32 %v173, %v191
      %v196 = vmul.f32 %v166, %v194
      %v197 = vmul.f32 %v167, %v195
      %vm198 = vcmp.eq.f32.partialorder %v156, %v166
      %vm199 = vcmp.eq.f32.partialorder %v157, %v167
      %vm200 = vcmp.eq.f32.partialorder %v159, %v166
      %vm201 = vcmp.eq.f32.partialorder %v160, %v167
      %vm202 = vmxor %vm198, 1
      %vm203 = vmxor %vm199, 1
      %vm204 = vmand %vm200, %vm202
      %vm205 = vmand %vm201, %vm203
      %v206 = vsub.f32 %v159, %v162
      %v207 = vsub.f32 %v160, %v163
      %v208 = vmul.f32 %v172, 2.0
      %v209 = vmul.f32 %v173, 2.0
      %v210 = vadd.f32 %v208, %v162
      %v211 = vadd.f32 %v209, %v163
      %v212 = vsub.f32 %v210, %v156
      %v213 = vsub.f32 %v211, %v157
      %v214 = vmul.f32 %v172, 4.0
      %v215 = vmul.f32 %v173, 4.0
      %v216 = vadd.f32 %v214, %v156
      %v217 = vadd.f32 %v215, %v157
      %v218 = vsub.f32 %v216, %v159
      %v219 = vsub.f32 %v217, %v160
      %v220 = vsel %vm204, %v212, %v218
      %v221 = vsel %vm205, %v213, %v219
      %v222 = vsel %vm198, %v206, %v220
      %v223 = vsel %vm199, %v207, %v221
      %v224 = vmul.f32 %v222, %v192
      %v225 = vmul.f32 %v223, %v193
      %v226 = vadd.f32 %v224, 0.47746482
      %v227 = vadd.f32 %v225, 0.47746482
      %vm228 = vcmp.lt.f32.partialorder %v226, 0.0
      %vm229 = vcmp.lt.f32.partialorder %v227, 0.0
      %v230 = vadd.f32 %v226, 6.0
      %v231 = vadd.f32 %v227, 6.0
      %v232 = vsel %vm228, %v230, %v226
      %v233 = vsel %vm229, %v231, %v227
      %vm234 = vcmp.ge.f32.partialorder %v232, 6.0
      %vm235 = vcmp.ge.f32.partialorder %v233, 6.0
      %v236 = vsub.f32 %v232, 6.0
      %v237 = vsub.f32 %v233, 6.0
      %v238 = vsel %vm234, %v236, %v232
      %v239 = vsel %vm235, %v237, %v233
      %v240 = vadd.f32 %v238, 5.0
      %v241 = vadd.f32 %v239, 5.0
      %vm242 = vcmp.ge.f32.partialorder %v240, 6.0
      %vm243 = vcmp.ge.f32.partialorder %v241, 6.0
      %v244 = vsub.f32 %v240, 6.0
      %v245 = vsub.f32 %v241, 6.0
      %v246 = vsel %vm242, %v244, %v240
      %v247 = vsel %vm243, %v245, %v241
      %v248 = vsub.f32 4.0, %v246
      %v249 = vsub.f32 4.0, %v247
      %v250 = vmin.f32 %v246, %v248
      %v251 = vmin.f32 %v247, %v249
      %v252 = vmax.f32 %v250, 0.0
      %v253 = vmax.f32 %v251, 0.0
      %v254 = vmin.f32 %v252, 1.0
      %v255 = vmin.f32 %v253, 1.0
      %v256 = vmul.f32 %v196, %v254
      %v257 = vmul.f32 %v197, %v255
      %v258 = vsub.f32 %v166, %v256
      %v259 = vsub.f32 %v167, %v257
      %260 = vst [vmem:[%s154] sm:$0xff] %v258
      %261 = vst [vmem:[%s154 + $0x8] sm:$0xff] %v259
      %v262 = vadd.f32 %v238, 3.0
      %v263 = vadd.f32 %v239, 3.0
      %vm264 = vcmp.ge.f32.partialorder %v262, 6.0
      %vm265 = vcmp.ge.f32.partialorder %v263, 6.0
      %v266 = vsub.f32 %v262, 6.0
      %v267 = vsub.f32 %v263, 6.0
      %v268 = vsel %vm264, %v266, %v262
      %v269 = vsel %vm265, %v267, %v263
      %v270 = vsub.f32 4.0, %v268
      %v271 = vsub.f32 4.0, %v269
      %v272 = vmin.f32 %v268, %v270
      %v273 = vmin.f32 %v269, %v271
      %v274 = vmax.f32 %v272, 0.0
      %v275 = vmax.f32 %v273, 0.0
      %v276 = vmin.f32 %v274, 1.0
      %v277 = vmin.f32 %v275, 1.0
      %v278 = vmul.f32 %v196, %v276
      %v279 = vmul.f32 %v197, %v277
      %v280 = vsub.f32 %v166, %v278
      %v281 = vsub.f32 %v167, %v279
      %s282 = scalar_lea.vmem %s154, 16
      %283 = vst [vmem:[%s282] sm:$0xff] %v280
      %284 = vst [vmem:[%s282 + $0x8] sm:$0xff] %v281
      %v285 = vadd.f32 %v238, 1.0
      %v286 = vadd.f32 %v239, 1.0
      %vm287 = vcmp.ge.f32.partialorder %v285, 6.0
      %vm288 = vcmp.ge.f32.partialorder %v286, 6.0
      %v289 = vsub.f32 %v285, 6.0
      %v290 = vsub.f32 %v286, 6.0
      %v291 = vsel %vm287, %v289, %v285
      %v292 = vsel %vm288, %v290, %v286
      %v293 = vsub.f32 4.0, %v291
      %v294 = vsub.f32 4.0, %v292
      %v295 = vmin.f32 %v291, %v293
      %v296 = vmin.f32 %v292, %v294
      %v297 = vmax.f32 %v295, 0.0
      %v298 = vmax.f32 %v296, 0.0
      %v299 = vmin.f32 %v297, 1.0
      %v300 = vmin.f32 %v298, 1.0
      %v301 = vmul.f32 %v196, %v299
      %v302 = vmul.f32 %v197, %v300
      %v303 = vsub.f32 %v166, %v301
      %v304 = vsub.f32 %v167, %v302
      %s305 = scalar_lea.vmem %s154, 32
      %306 = vst [vmem:[%s305] sm:$0xff] %v303
      %307 = vst [vmem:[%s305 + $0x8] sm:$0xff] %v304
      %s308 = smul.u32 2, %s17
      %p309 = scmp.lt.s32.totalorder %s16, 1
      %s310 = scalar_select %p309, %s16, 1
      %p311 = scmp.lt.s32.totalorder %s308, 1
      %s312 = scalar_select %p311, %s308, 1
      %s313 = smul.addr %s310, 6
      %s314 = sadd.s32 %s312, %s313
      %s315 = smul.addr %s314, 8
      %s316 = scalar_lea.vmem %s1, %s315
      // Predicated region
      $region25: #{_adjust_hue_impl.1} parent=23 // pred_check
        %p317 = pneg %p72
      $region26: #{_adjust_hue_impl.1} parent=23 // pred_check_branch
        %319 = sbr.rel (%p317) target = $region28
      $region27: #{_adjust_hue_impl.1} parent=23 // pred_region
        %s320 = smul.u32 2, %s17
      $region28: #{_adjust_hue_impl.1} parent=23 // pred_fallthru
        _
    $region24: #{_adjust_hue_impl.1} parent=5 // pred_fallthru
      _
    %p321 = scmp.le.s32.totalorder 2, %s7
    // Predicated region
    $region29: #{_adjust_hue_impl.1} parent=5 // pred_check
      %p322 = pneg %p321
    $region30: #{_adjust_hue_impl.1} parent=5 // pred_check_branch
      %324 = sbr.rel (%p322) target = $region32
    $region31: #{_adjust_hue_impl.1} parent=5 // pred_region
      %s325 = ssub.s32 %s7, 2
      // Predicated region
      $region33: #{_adjust_hue_impl.1} parent=31 // pred_check
        %p326 = pneg %p78
      $region34: #{_adjust_hue_impl.1} parent=31 // pred_check_branch
        %328 = sbr.rel (%p326) target = $region36
      $region35: #{_adjust_hue_impl.1} parent=31 // pred_region
        %s329 = smul.u32 2, %s19
        %p330 = scmp.lt.s32.totalorder %s18, 1
        %s331 = scalar_select %p330, %s18, 1
        %p332 = scmp.lt.s32.totalorder %s329, 1
        %s333 = scalar_select %p332, %s329, 1
        %s334 = smul.addr %s331, 6
        %s335 = sadd.s32 %s333, %s334
        %s336 = smul.addr %s335, 8
        %s337 = scalar_lea.vmem %s1, %s336
      $region36: #{_adjust_hue_impl.1} parent=31 // pred_fallthru
        _
    $region32: #{_adjust_hue_impl.1} parent=5 // pred_fallthru
      _
  $region6: #{_adjust_hue_impl.1} parent=0 // loop_footer
    %s11 = sadd.s32 1, %s7
  $region7: #{_adjust_hue_impl.1} parent=0 // loop_footer_branch
    %6 = sbr.rel target = $region3
  $region8: #{_adjust_hue_impl.1} parent=0 // loop_exit
    _

</llo_original>
